<compile_context>
chip_gen: v6e
topology: v6e:2x2x1
jax: 0.10.0
libtpu: 0.0.40
codegen_flags: <defaults>
</compile_context>

<pallas_src>
import jax
import jax.numpy as jnp
from jax.experimental import pallas as pl
from jax.experimental.pallas import tpu as pltpu

BN_EPS = 1e-5
MAX_TILE_B = 4096     # max batch tile (multiple of 8); fits easily in 32 MiB VMEM
SPLIT_MIN_B = 1024    # above this, force >= 2 grid steps (v7x has 2 TensorCores)


def _round_up(x, m):
    return ((x + m - 1) // m) * m


def _choose_tile_b(B):
    """Pick an 8-aligned batch tile <= B (except tiny B), never padding inputs."""
    if B <= 8:
        return B                                   # single masked tile, full-dim block
    if B > SPLIT_MIN_B:
        # >= 2 grid steps so the "parallel" axis can shard across v7x's 2 TCs.
        return min(MAX_TILE_B, _round_up(pl.cdiv(B, 2), 8))
    return max(8, (B // 8) * 8)                    # 8-aligned, ragged last tile if needed


def _linkpred_kernel(sf_ref, nf_ref, wl_ref, labp_ref, wo_ref, featp_ref,
                     blin_ref, out_ref):
    # sf_ref    : [tile_b, dim]   subgraph-feature tile
    # nf_ref    : [tile_b, 2H]    flattened node-feature tile (endpoints concatenated)
    # wl_ref    : [dim, dim]      label Linear weight, BN folded in (resident)
    # labp_ref  : [2, dim]        row0 = fused label bias, row1 = final-lin weights (label part)
    # wo_ref    : [H, H]          lin_out weight, BN folded in (resident)
    # featp_ref : [2, H]          row0 = fused feature bias, row1 = final-lin weights (feat part)
    # blin_ref  : SMEM f32[1]     final-lin bias
    # out_ref   : [1, tile_b]     lane-dense output row for this grid step
    H = nf_ref.shape[1] // 2

    # ---- label branch: relu(sf @ W_label' + b_label')  (BN folded; dropout = identity) ----
    x = jnp.dot(sf_ref[...], wl_ref[...], preferred_element_type=jnp.float32)
    x = jnp.maximum(x + labp_ref[0:1, :], 0.0)

    # ---- feature branch: relu(hadamard(node pair) @ W_out' + b_out') ----
    nf = nf_ref[...]                               # [tile_b, 2H]
    h = nf[:, :H] * nf[:, H:]                      # hadamard of the two endpoints
    h = jnp.dot(h, wo_ref[...], preferred_element_type=jnp.float32)
    h = jnp.maximum(h + featp_ref[0:1, :], 0.0)

    # ---- final lin over concat([x, h]) == split N=1 dot-products ----
    # VPU multiply + lane reduction (MXU would be <1% utilized at N=1).
    row = (jnp.sum(x * labp_ref[1:2, :], axis=-1)
           + jnp.sum(h * featp_ref[1:2, :], axis=-1)
           + blin_ref[0])                          # [tile_b]
    out_ref[...] = row[None, :].astype(out_ref.dtype)   # store as a lane-dense row


def _fuse_bn(W, b, gamma, beta, mean, var, eps=BN_EPS):
    """Fold an eval-mode BatchNorm1d into the preceding Linear (W:[in,out], b:[1,out])."""
    s = gamma * jax.lax.rsqrt(var + eps)           # [1, out]
    return W * s, (b - mean) * s + beta


def link_predictor_forward(sf, node_features, params):
    """sf: [B, dim] f32, node_features: [B, 2, H] f32 -> [B, 1] f32 (eval mode)."""
    B, dim = sf.shape
    H = node_features.shape[-1]

    # ---- wrapper-side parameter fusion / packing (cheap, once per call) ----
    W_lab, b_lab = _fuse_bn(params["W_label"], params["b_label"],
                            params["bn_labels_gamma"], params["bn_labels_beta"],
                            params["bn_labels_mean"], params["bn_labels_var"])
    W_out, b_out = _fuse_bn(params["W_out"], params["b_out"],
                            params["bn_feats_gamma"], params["bn_feats_beta"],
                            params["bn_feats_mean"], params["bn_feats_var"])

    lab_pack = jnp.concatenate([b_lab, params["W_lin_labels"].T], axis=0)   # [2, dim]
    feat_pack = jnp.concatenate([b_out, params["W_lin_feats"].T], axis=0)   # [2, H]
    b_lin = params["b_lin"].reshape((1,)).astype(jnp.float32)               # SMEM scalar

    # Free, contiguous reshape: [B, 2, H] -> [B, 2H] (lane-dense 2-D block in VMEM).
    nf_flat = node_features.reshape(B, 2 * H)

    # ---- batch tiling: cdiv grid, no input padding, ragged last tile discarded ----
    tile_b = _choose_tile_b(B)
    num_tiles = pl.cdiv(B, tile_b)

    out_rows = pl.pallas_call(
        _linkpred_kernel,
        out_shape=jax.ShapeDtypeStruct((num_tiles, tile_b), jnp.float32),
        grid=(num_tiles,),
        in_specs=[
            pl.BlockSpec((tile_b, dim), lambda i: (i, 0)),        # sf tile
            pl.BlockSpec((tile_b, 2 * H), lambda i: (i, 0)),      # flattened node features
            pl.BlockSpec((dim, dim), lambda i: (0, 0)),           # W_label' (resident)
            pl.BlockSpec((2, dim), lambda i: (0, 0)),             # [b_label' ; w_lin_labels]
            pl.BlockSpec((H, H), lambda i: (0, 0)),               # W_out' (resident)
            pl.BlockSpec((2, H), lambda i: (0, 0)),               # [b_out' ; w_lin_feats]
            pl.BlockSpec(memory_space=pltpu.MemorySpace.SMEM),    # final-lin bias scalar
        ],
        out_specs=pl.BlockSpec((1, tile_b), lambda i: (i, 0)),    # lane-dense output row
        compiler_params=pltpu.CompilerParams(
            dimension_semantics=("parallel",),
            vmem_limit_bytes=32 * 1024 * 1024),
    )(sf, nf_flat, W_lab, lab_pack, W_out, feat_pack, b_lin)

    # Contiguous reshape + slice: drop garbage rows from the ragged last tile.
    return out_rows.reshape(-1)[:B].reshape(B, 1)


def init_params(key, dim, hidden):
    """Deterministic synthetic parameters (PyTorch shapes, stored transposed)."""
    ks = jax.random.split(key, 10)

    def lin_w(k, n_in, n_out):
        # torch Linear weight is [out, in]; store transposed [in, out]
        bound = 1.0 / jnp.sqrt(n_in)
        return jax.random.uniform(k, (n_in, n_out), jnp.float32, -bound, bound)

    def lin_b(k, n_in, n_out):
        bound = 1.0 / jnp.sqrt(n_in)
        return jax.random.uniform(k, (1, n_out), jnp.float32, -bound, bound)

    p = {}
    # label_lin_layer: dim -> dim
    p["W_label"] = lin_w(ks[0], dim, dim)
    p["b_label"] = lin_b(ks[1], dim, dim)
    # bn_labels (running stats, eval mode)
    p["bn_labels_gamma"] = jax.random.uniform(ks[2], (1, dim), jnp.float32, 0.5, 1.5)
    p["bn_labels_beta"] = jax.random.uniform(ks[2], (1, dim), jnp.float32, -0.1, 0.1)
    p["bn_labels_mean"] = jax.random.normal(ks[3], (1, dim), jnp.float32) * 0.1
    p["bn_labels_var"] = jax.random.uniform(ks[3], (1, dim), jnp.float32, 0.5, 1.5)
    # lin_out: hidden -> hidden   (lin_feat exists in __init__ but is unused in forward)
    p["W_out"] = lin_w(ks[4], hidden, hidden)
    p["b_out"] = lin_b(ks[5], hidden, hidden)
    # bn_feats
    p["bn_feats_gamma"] = jax.random.uniform(ks[6], (1, hidden), jnp.float32, 0.5, 1.5)
    p["bn_feats_beta"] = jax.random.uniform(ks[6], (1, hidden), jnp.float32, -0.1, 0.1)
    p["bn_feats_mean"] = jax.random.normal(ks[7], (1, hidden), jnp.float32) * 0.1
    p["bn_feats_var"] = jax.random.uniform(ks[7], (1, hidden), jnp.float32, 0.5, 1.5)
    # final lin: (dim + hidden) -> 1, split along the concat axis
    w_lin_full = lin_w(ks[8], dim + hidden, 1)
    p["W_lin_labels"] = w_lin_full[:dim, :]
    p["W_lin_feats"] = w_lin_full[dim:, :]
    p["b_lin"] = lin_b(ks[9], dim + hidden, 1)
    return p


def reference_forward(sf, node_features, p):
    """Pure-JAX reference of the original (un-fused) forward pass (eval mode)."""
    x = sf @ p["W_label"] + p["b_label"]
    x = (x - p["bn_labels_mean"]) * jax.lax.rsqrt(p["bn_labels_var"] + BN_EPS)
    x = x * p["bn_labels_gamma"] + p["bn_labels_beta"]
    x = jnp.maximum(x, 0.0)

    h = node_features[:, 0, :] * node_features[:, 1, :]
    h = h @ p["W_out"] + p["b_out"]
    h = (h - p["bn_feats_mean"]) * jax.lax.rsqrt(p["bn_feats_var"] + BN_EPS)
    h = h * p["bn_feats_gamma"] + p["bn_feats_beta"]
    h = jnp.maximum(h, 0.0)

    cat = jnp.concatenate([x, h], axis=1)
    w_full = jnp.concatenate([p["W_lin_labels"], p["W_lin_feats"]], axis=0)
    return cat @ w_full + p["b_lin"]


if __name__ == "__main__":
    # args: max_hash_hops=2 -> dim = 2*(2+2) = 8; hidden_channels=32; batch=8
    MAX_HASH_HOPS = 2
    DIM = MAX_HASH_HOPS * (MAX_HASH_HOPS + 2)   # 8
    HIDDEN = 32
    BATCH = 8

    key = jax.random.PRNGKey(0)
    k_sf, k_feat, k_params = jax.random.split(key, 3)

    sf = jax.random.normal(k_sf, (BATCH, DIM), jnp.float32)
    node_features = jax.random.normal(k_feat, (BATCH, 2, HIDDEN), jnp.float32)
    params = init_params(k_params, DIM, HIDDEN)

    fwd = jax.jit(link_predictor_forward)
    out = fwd(sf, node_features, params)
    out = jax.block_until_ready(out)

    ref = reference_forward(sf, node_features, params)
    assert out.shape == (BATCH, 1)
    assert jnp.allclose(out, ref, atol=1e-4, rtol=1e-4), "mismatch vs reference"

    print("KERNEL_OK")
</pallas_src>

<mosaic_0001>
module attributes {stable_mosaic.version = 11 : i64} {
  func.func @_linkpred_kernel(%arg0: i32, %arg1: memref<8x8xf32, #tpu.memory_space<vmem>>, %arg2: memref<8x64xf32, #tpu.memory_space<vmem>>, %arg3: memref<8x8xf32, #tpu.memory_space<vmem>>, %arg4: memref<2x8xf32, #tpu.memory_space<vmem>>, %arg5: memref<32x32xf32, #tpu.memory_space<vmem>>, %arg6: memref<2x32xf32, #tpu.memory_space<vmem>>, %arg7: memref<1xf32, #tpu.memory_space<smem>>, %arg8: memref<1x8xf32, #tpu.memory_space<vmem>>) attributes {dimension_semantics = [#tpu.dimension_semantics<parallel>], iteration_bounds = array<i64: 1>, scalar_prefetch = 0 : i64, scratch_operands = 0 : i64, tpu.core_type = #tpu.core_type<tc>, window_params = [{transform_indices = @transform_0, window_bounds = array<i64: 8, 8>}, {transform_indices = @transform_1, window_bounds = array<i64: 8, 64>}, {pipeline_mode = #tpu.pipeline_mode<synchronous>, transform_indices = @transform_2, window_bounds = array<i64: 8, 8>}, {pipeline_mode = #tpu.pipeline_mode<synchronous>, transform_indices = @transform_3, window_bounds = array<i64: 2, 8>}, {pipeline_mode = #tpu.pipeline_mode<synchronous>, transform_indices = @transform_4, window_bounds = array<i64: 32, 32>}, {pipeline_mode = #tpu.pipeline_mode<synchronous>, transform_indices = @transform_5, window_bounds = array<i64: 2, 32>}, {transform_indices = @transform_6, window_bounds = array<i64: 1>}, {transform_indices = @transform_7, window_bounds = array<i64: 1, 8>}]} {
    %c0 = arith.constant 0 : index
    %c0_0 = arith.constant 0 : index
    %0 = vector.load %arg1[%c0, %c0_0] : memref<8x8xf32, #tpu.memory_space<vmem>>, vector<8x8xf32>
    %c0_1 = arith.constant 0 : index
    %c0_2 = arith.constant 0 : index
    %1 = vector.load %arg3[%c0_1, %c0_2] : memref<8x8xf32, #tpu.memory_space<vmem>>, vector<8x8xf32>
    %cst = arith.constant dense<0.000000e+00> : vector<8x8xf32>
    %2 = tpu.matmul %0, %1, %cst {dimension_numbers = #tpu.dot_dimension_numbers<[1], [0], [0], [1], [0, 0, 1, 1], [], []>} : vector<8x8xf32>, vector<8x8xf32>, vector<8x8xf32> -> vector<8x8xf32>
    %c0_3 = arith.constant 0 : index
    %c0_4 = arith.constant 0 : index
    %3 = vector.load %arg4[%c0_3, %c0_4] : memref<2x8xf32, #tpu.memory_space<vmem>>, vector<1x8xf32>
    %4 = vector.broadcast %3 : vector<1x8xf32> to vector<8x8xf32>
    %5 = arith.addf %2, %4 : vector<8x8xf32>
    %cst_5 = arith.constant 0.000000e+00 : f32
    %6 = vector.broadcast %cst_5 : f32 to vector<8x8xf32>
    %7 = arith.maximumf %5, %6 : vector<8x8xf32>
    %c0_6 = arith.constant 0 : index
    %c0_7 = arith.constant 0 : index
    %8 = vector.load %arg2[%c0_6, %c0_7] : memref<8x64xf32, #tpu.memory_space<vmem>>, vector<8x64xf32>
    %9 = vector.extract_strided_slice %8 {offsets = [0, 0], sizes = [8, 32], strides = [1, 1]} : vector<8x64xf32> to vector<8x32xf32>
    %10 = vector.extract_strided_slice %8 {offsets = [0, 32], sizes = [8, 32], strides = [1, 1]} : vector<8x64xf32> to vector<8x32xf32>
    %11 = arith.mulf %9, %10 : vector<8x32xf32>
    %c0_8 = arith.constant 0 : index
    %c0_9 = arith.constant 0 : index
    %12 = vector.load %arg5[%c0_8, %c0_9] : memref<32x32xf32, #tpu.memory_space<vmem>>, vector<32x32xf32>
    %cst_10 = arith.constant dense<0.000000e+00> : vector<8x32xf32>
    %13 = tpu.matmul %11, %12, %cst_10 {dimension_numbers = #tpu.dot_dimension_numbers<[1], [0], [0], [1], [0, 0, 1, 1], [], []>} : vector<8x32xf32>, vector<32x32xf32>, vector<8x32xf32> -> vector<8x32xf32>
    %c0_11 = arith.constant 0 : index
    %c0_12 = arith.constant 0 : index
    %14 = vector.load %arg6[%c0_11, %c0_12] : memref<2x32xf32, #tpu.memory_space<vmem>>, vector<1x32xf32>
    %15 = vector.broadcast %14 : vector<1x32xf32> to vector<8x32xf32>
    %16 = arith.addf %13, %15 : vector<8x32xf32>
    %cst_13 = arith.constant 0.000000e+00 : f32
    %17 = vector.broadcast %cst_13 : f32 to vector<8x32xf32>
    %18 = arith.maximumf %16, %17 : vector<8x32xf32>
    %c1 = arith.constant 1 : index
    %c0_14 = arith.constant 0 : index
    %19 = vector.load %arg4[%c1, %c0_14] : memref<2x8xf32, #tpu.memory_space<vmem>>, vector<1x8xf32>
    %20 = vector.broadcast %19 : vector<1x8xf32> to vector<8x8xf32>
    %21 = arith.mulf %7, %20 : vector<8x8xf32>
    %cst_15 = arith.constant dense<0.000000e+00> : vector<8xf32>
    %22 = vector.multi_reduction <add>, %21, %cst_15 [1] : vector<8x8xf32> to vector<8xf32>
    %c1_16 = arith.constant 1 : index
    %c0_17 = arith.constant 0 : index
    %23 = vector.load %arg6[%c1_16, %c0_17] : memref<2x32xf32, #tpu.memory_space<vmem>>, vector<1x32xf32>
    %24 = vector.broadcast %23 : vector<1x32xf32> to vector<8x32xf32>
    %25 = arith.mulf %18, %24 : vector<8x32xf32>
    %cst_18 = arith.constant dense<0.000000e+00> : vector<8xf32>
    %26 = vector.multi_reduction <add>, %25, %cst_18 [1] : vector<8x32xf32> to vector<8xf32>
    %27 = arith.addf %22, %26 : vector<8xf32>
    %c0_19 = arith.constant 0 : index
    %28 = memref.load %arg7[%c0_19] : memref<1xf32, #tpu.memory_space<smem>>
    %29 = vector.broadcast %28 : f32 to vector<8xf32>
    %30 = arith.addf %27, %29 : vector<8xf32>
    %31 = vector.shape_cast %30 : vector<8xf32> to vector<1x8xf32>
    %c0_20 = arith.constant 0 : index
    %c0_21 = arith.constant 0 : index
    %32 = vector.load %arg8[%c0_20, %c0_21] : memref<1x8xf32, #tpu.memory_space<vmem>>, vector<1x8xf32>
    tpu.vector_store %arg8[%c0_20, %c0_21], %31 {strides = array<i32>} : memref<1x8xf32, #tpu.memory_space<vmem>>, vector<1x8xf32>,
    return
  }
  func.func @transform_0(%arg0: i32) -> (i32, i32) {
    %c0_i32 = arith.constant 0 : i32
    %c0_i32_0 = arith.constant 0 : i32
    return %arg0, %c0_i32 : i32, i32
  }
  func.func @transform_1(%arg0: i32) -> (i32, i32) {
    %c0_i32 = arith.constant 0 : i32
    %c0_i32_0 = arith.constant 0 : i32
    return %arg0, %c0_i32 : i32, i32
  }
  func.func @transform_2(%arg0: i32) -> (i32, i32) {
    %c0_i32 = arith.constant 0 : i32
    %c0_i32_0 = arith.constant 0 : i32
    %c0_i32_1 = arith.constant 0 : i32
    return %c0_i32, %c0_i32_0 : i32, i32
  }
  func.func @transform_3(%arg0: i32) -> (i32, i32) {
    %c0_i32 = arith.constant 0 : i32
    %c0_i32_0 = arith.constant 0 : i32
    %c0_i32_1 = arith.constant 0 : i32
    return %c0_i32, %c0_i32_0 : i32, i32
  }
  func.func @transform_4(%arg0: i32) -> (i32, i32) {
    %c0_i32 = arith.constant 0 : i32
    %c0_i32_0 = arith.constant 0 : i32
    %c0_i32_1 = arith.constant 0 : i32
    return %c0_i32, %c0_i32_0 : i32, i32
  }
  func.func @transform_5(%arg0: i32) -> (i32, i32) {
    %c0_i32 = arith.constant 0 : i32
    %c0_i32_0 = arith.constant 0 : i32
    %c0_i32_1 = arith.constant 0 : i32
    return %c0_i32, %c0_i32_0 : i32, i32
  }
  func.func @transform_6(%arg0: i32) -> i32 {
    %c0_i32 = arith.constant 0 : i32
    %c0_i32_0 = arith.constant 0 : i32
    return %c0_i32 : i32
  }
  func.func @transform_7(%arg0: i32) -> (i32, i32) {
    %c0_i32 = arith.constant 0 : i32
    %c0_i32_0 = arith.constant 0 : i32
    return %arg0, %c0_i32 : i32, i32
  }
}

</mosaic_0001>

<llo_original>
// kernel: link_predictor_forward.1
$region0: #{link_predictor_forward.1}
  #allocation0 [shape = 'u32[]', space=smem, size = 0x4, offset = 0x4, fixed_abs, tag = 'smem constant byte address 0x4 - core index']
  #allocation1 [shape = 'u32[144,128]{1,0:T(1,128)}', space=vmem, size = 0x12000, scoped, tag = 'internal scratch']
  #allocation2 [shape = 'f32[1]{0:T(128)S(6)}', space=smem, size = 0x200, scoped, tag = 'scoped memory for link_predictor_forward.1']
  %s0 = inlined_call_operand.vmem [shape: f32[8,8], index: 0, kind: input, shape index: {}]
  %s1 = inlined_call_operand.vmem [shape: f32[8,64], index: 1, kind: input, shape index: {}]
  %s2 = inlined_call_operand.vmem [shape: f32[8,8], index: 2, kind: input, shape index: {}]
  %s3 = inlined_call_operand.vmem [shape: f32[2,8], index: 3, kind: input, shape index: {}]
  %s4 = inlined_call_operand.vmem [shape: f32[32,32], index: 4, kind: input, shape index: {}]
  %s5 = inlined_call_operand.vmem [shape: f32[2,32], index: 5, kind: input, shape index: {}]
  %s6 = inlined_call_operand.<no memory space> [shape: f32[1], index: 6, kind: input, shape index: {}]
  %s7 = inlined_call_operand.hbm [shape: f32[1,8], index: 7, kind: output, shape index: {}]
  %s8 = sld [smem:[#allocation0]]
  $region38: #{link_predictor_forward.1} parent=0
    _
  %s10 = ssub.s32 1, %s8
  %s11 = scalar_select 0, %s10, %s8
  %12 = sst [smem:[#allocation2]] %s6
  $region1: #{link_predictor_forward.1} parent=0
    #allocation3 [shape = 'u8[512]{0}', space=vmem, size = 0x400, scoped, tag = 'output window, operand 0, single buffered']
    #allocation4 [shape = 's32[1]{0}', space=sflag, size = 0x4, scoped, tag = 'scoped memory for link_predictor_forward.1']
    %13 = vsyncpa [#allocation4], 0
    // Predicated region
    $region2: #{link_predictor_forward.1} parent=1 // pred_check
      _
    $region3: #{link_predictor_forward.1} parent=1 // pred_check_branch
      %15 = sbr.rel (0) target = $region5
    $region4: #{link_predictor_forward.1} parent=1 // pred_region
      _
    $region5: #{link_predictor_forward.1} parent=1 // pred_fallthru
      _
    // Predicated region
    $region6: #{link_predictor_forward.1} parent=1 // pred_check
      _
    $region7: #{link_predictor_forward.1} parent=1 // pred_check_branch
      %17 = sbr.rel (0) target = $region9
    $region8: #{link_predictor_forward.1} parent=1 // pred_region
      _
    $region9: #{link_predictor_forward.1} parent=1 // pred_fallthru
      _
    // Predicated region
    $region10: #{link_predictor_forward.1} parent=1 // pred_check
      _
    $region11: #{link_predictor_forward.1} parent=1 // pred_check_branch
      %19 = sbr.rel (0) target = $region13
    $region12: #{link_predictor_forward.1} parent=1 // pred_region
      _
    $region13: #{link_predictor_forward.1} parent=1 // pred_fallthru
      _
    // Predicated region
    $region14: #{link_predictor_forward.1} parent=1 // pred_check
      _
    $region15: #{link_predictor_forward.1} parent=1 // pred_check_branch
      %21 = sbr.rel (0) target = $region17
    $region16: #{link_predictor_forward.1} parent=1 // pred_region
      _
    $region17: #{link_predictor_forward.1} parent=1 // pred_fallthru
      _
    // Predicated region
    $region18: #{link_predictor_forward.1} parent=1 // pred_check
      _
    $region19: #{link_predictor_forward.1} parent=1 // pred_check_branch
      %23 = sbr.rel (0) target = $region21
    $region20: #{link_predictor_forward.1} parent=1 // pred_region
      _
    $region21: #{link_predictor_forward.1} parent=1 // pred_fallthru
      _
    // Predicated region
    $region22: #{link_predictor_forward.1} parent=1 // pred_check
      _
    $region23: #{link_predictor_forward.1} parent=1 // pred_check_branch
      %25 = sbr.rel (0) target = $region25
    $region24: #{link_predictor_forward.1} parent=1 // pred_region
      _
    $region25: #{link_predictor_forward.1} parent=1 // pred_fallthru
      _
    // Predicated region
    $region26: #{link_predictor_forward.1} parent=1 // pred_check
      _
    $region27: #{link_predictor_forward.1} parent=1 // pred_check_branch
      %27 = sbr.rel (0) target = $region29
    $region28: #{link_predictor_forward.1} parent=1 // pred_region
      _
    $region29: #{link_predictor_forward.1} parent=1 // pred_fallthru
      _
    %v28 = vld [vmem:[%s0] sm:$0xff]
    %v29 = vld [vmem:[%s2] sm:$0xff]
    %v30 = vld [vmem:[%s3] sm:$0x1]
    %v31 = vlaneseq
    %v32 = vshrl.u32 %v31, 7
    %v33 = vsub.s32 0, %v32
    %v34 = vrot.slane %v30, %v33
    %vm35 = vcmask 64512
    %v37 = vsel %vm35, %v28, 0
    %39 = vmatprep.subr.mxu0 0.0
    %40 = vmatpush1.msra.mxu0 0.0
    %41 = vmatprep.subr.mxu0 0.0
    %42 = vmatpush1.msra.mxu0 0.0
    %43 = vmatprep.subr.mxu0 0.0
    %44 = vmatpush1.msra.mxu0 0.0
    %45 = vmatprep.subr.mxu0 0.0
    %46 = vmatpush1.msra.mxu0 0.0
    %47 = vmatprep.subr.mxu0 0.0
    %48 = vmatpush1.msra.mxu0 0.0
    %49 = vmatprep.subr.mxu0 0.0
    %50 = vmatpush1.msra.mxu0 0.0
    %51 = vmatprep.subr.mxu0 0.0
    %52 = vmatpush1.msra.mxu0 0.0
    %53 = vmatprep.subr.mxu0 0.0
    %54 = vmatpush1.msra.mxu0 0.0
    %55 = vmatprep.subr.mxu0 0.0
    %56 = vmatpush1.msra.mxu0 0.0
    %57 = vmatprep.subr.mxu0 0.0
    %58 = vmatpush1.msra.mxu0 0.0
    %59 = vmatprep.subr.mxu0 0.0
    %60 = vmatpush1.msra.mxu0 0.0
    %61 = vmatprep.subr.mxu0 0.0
    %62 = vmatpush1.msra.mxu0 0.0
    %63 = vmatprep.subr.mxu0 0.0
    %64 = vmatpush1.msra.mxu0 0.0
    %65 = vmatprep.subr.mxu0 0.0
    %66 = vmatpush1.msra.mxu0 0.0
    %67 = vmatprep.subr.mxu0 0.0
    %68 = vmatpush1.msra.mxu0 0.0
    %69 = vmatprep.subr.mxu0 0.0
    %70 = vmatpush1.msra.mxu0 %v29
    %71 = vmatprep.subr.mxu0 0.0
    %72 = vmatpush2.msra.mxu0 0.0
    %73 = vmatprep.subr.mxu0 0.0
    %74 = vmatpush2.msra.mxu0 0.0
    %75 = vmatprep.subr.mxu0 0.0
    %76 = vmatpush2.msra.mxu0 0.0
    %77 = vmatprep.subr.mxu0 0.0
    %78 = vmatpush2.msra.mxu0 0.0
    %79 = vmatprep.subr.mxu0 0.0
    %80 = vmatpush2.msra.mxu0 0.0
    %81 = vmatprep.subr.mxu0 0.0
    %82 = vmatpush2.msra.mxu0 0.0
    %83 = vmatprep.subr.mxu0 0.0
    %84 = vmatpush2.msra.mxu0 0.0
    %85 = vmatprep.subr.mxu0 0.0
    %86 = vmatpush2.msra.mxu0 0.0
    %87 = vmatprep.subr.mxu0 0.0
    %88 = vmatpush2.msra.mxu0 0.0
    %89 = vmatprep.subr.mxu0 0.0
    %90 = vmatpush2.msra.mxu0 0.0
    %91 = vmatprep.subr.mxu0 0.0
    %92 = vmatpush2.msra.mxu0 0.0
    %93 = vmatprep.subr.mxu0 0.0
    %94 = vmatpush2.msra.mxu0 0.0
    %95 = vmatprep.subr.mxu0 0.0
    %96 = vmatpush2.msra.mxu0 0.0
    %97 = vmatprep.subr.mxu0 0.0
    %98 = vmatpush2.msra.mxu0 0.0
    %99 = vmatprep.subr.mxu0 0.0
    %100 = vmatpush2.msra.mxu0 0.0
    %101 = vmatprep.subr.mxu0 0.0
    %102 = vmatpush2.msra.mxu0 0.0
    %103 = vmatprep.mubr.f32.mxu0 0.0
    %104 = vmatmul.mubr.f32.gmra.mxu0 %v37
    %v105 = vpop.f32.mrf.mxu0
    %v106 = vadd.f32 %v34, %v105
    %v107 = vpop.f32.mrf.mxu0
    %108 = vdwg.mxu0
    %v109 = vmax.f32 %v106, 0.0
    %v110 = vld [vmem:[%s1] sm:$0xff]
    %112 = vrot.lane.b32.xlu0 %v110, 96
    %v113 = vpop.permute.xlu0 %112
    %v115 = vmul.f32 %v110, %v113
    %v116 = vld [vmem:[%s4] sm:$0xff]
    %v117 = vld [vmem:[%s4 + $0x8] sm:$0xff]
    %v118 = vld [vmem:[%s4 + $0x10] sm:$0xff]
    %v119 = vld [vmem:[%s4 + $0x18] sm:$0xff]
    %v120 = vld [vmem:[%s5] sm:$0x1]
    %v121 = vlaneseq
    %v122 = vshrl.u32 %v121, 7
    %v123 = vsub.s32 0, %v122
    %v124 = vrot.slane %v120, %v123
    %vm125 = vcmask 261120
    %v127 = vsel %vm125, %v115, 0
    %129 = vmatprep.subr.mxu0 0.0
    %130 = vmatpush1.msra.mxu0 0.0
    %131 = vmatprep.subr.mxu0 0.0
    %132 = vmatpush1.msra.mxu0 0.0
    %133 = vmatprep.subr.mxu0 0.0
    %134 = vmatpush1.msra.mxu0 0.0
    %135 = vmatprep.subr.mxu0 0.0
    %136 = vmatpush1.msra.mxu0 0.0
    %137 = vmatprep.subr.mxu0 0.0
    %138 = vmatpush1.msra.mxu0 0.0
    %139 = vmatprep.subr.mxu0 0.0
    %140 = vmatpush1.msra.mxu0 0.0
    %141 = vmatprep.subr.mxu0 0.0
    %142 = vmatpush1.msra.mxu0 0.0
    %143 = vmatprep.subr.mxu0 0.0
    %144 = vmatpush1.msra.mxu0 0.0
    %145 = vmatprep.subr.mxu0 0.0
    %146 = vmatpush1.msra.mxu0 0.0
    %147 = vmatprep.subr.mxu0 0.0
    %148 = vmatpush1.msra.mxu0 0.0
    %149 = vmatprep.subr.mxu0 0.0
    %150 = vmatpush1.msra.mxu0 0.0
    %151 = vmatprep.subr.mxu0 0.0
    %152 = vmatpush1.msra.mxu0 0.0
    %153 = vmatprep.subr.mxu0 0.0
    %154 = vmatpush1.msra.mxu0 %v119
    %155 = vmatprep.subr.mxu0 0.0
    %156 = vmatpush1.msra.mxu0 %v118
    %157 = vmatprep.subr.mxu0 0.0
    %158 = vmatpush1.msra.mxu0 %v117
    %159 = vmatprep.subr.mxu0 0.0
    %160 = vmatpush1.msra.mxu0 %v116
    %161 = vmatprep.subr.mxu0 0.0
    %162 = vmatpush2.msra.mxu0 0.0
    %163 = vmatprep.subr.mxu0 0.0
    %164 = vmatpush2.msra.mxu0 0.0
    %165 = vmatprep.subr.mxu0 0.0
    %166 = vmatpush2.msra.mxu0 0.0
    %167 = vmatprep.subr.mxu0 0.0
    %168 = vmatpush2.msra.mxu0 0.0
    %169 = vmatprep.subr.mxu0 0.0
    %170 = vmatpush2.msra.mxu0 0.0
    %171 = vmatprep.subr.mxu0 0.0
    %172 = vmatpush2.msra.mxu0 0.0
    %173 = vmatprep.subr.mxu0 0.0
    %174 = vmatpush2.msra.mxu0 0.0
    %175 = vmatprep.subr.mxu0 0.0
    %176 = vmatpush2.msra.mxu0 0.0
    %177 = vmatprep.subr.mxu0 0.0
    %178 = vmatpush2.msra.mxu0 0.0
    %179 = vmatprep.subr.mxu0 0.0
    %180 = vmatpush2.msra.mxu0 0.0
    %181 = vmatprep.subr.mxu0 0.0
    %182 = vmatpush2.msra.mxu0 0.0
    %183 = vmatprep.subr.mxu0 0.0
    %184 = vmatpush2.msra.mxu0 0.0
    %185 = vmatprep.subr.mxu0 0.0
    %186 = vmatpush2.msra.mxu0 0.0
    %187 = vmatprep.subr.mxu0 0.0
    %188 = vmatpush2.msra.mxu0 0.0
    %189 = vmatprep.subr.mxu0 0.0
    %190 = vmatpush2.msra.mxu0 0.0
    %191 = vmatprep.subr.mxu0 0.0
    %192 = vmatpush2.msra.mxu0 0.0
    %193 = vmatprep.mubr.f32.mxu0 0.0
    %194 = vmatmul.mubr.f32.gmra.mxu0 %v127
    %v195 = vpop.f32.mrf.mxu0
    %v196 = vadd.f32 %v124, %v195
    %v197 = vpop.f32.mrf.mxu0
    %198 = vdwg.mxu0
    %v199 = vmax.f32 %v196, 0.0
    %v200 = vld [vmem:[%s3 + $0x1] sm:$0x1]
    %v201 = vlaneseq
    %v202 = vshrl.u32 %v201, 7
    %v203 = vsub.s32 0, %v202
    %v204 = vrot.slane %v200, %v203
    %v205 = vmul.f32 %v109, %v204
    %v206 = vsel %vm35, %v205, 0.0
    %207 = vadd.xlane.f32.xlu0 %v206
    %v208 = vpop.xlane.xlu0 %207
    %v209 = vld [vmem:[%s5 + $0x1] sm:$0x1]
    %v210 = vlaneseq
    %v211 = vshrl.u32 %v210, 7
    %v212 = vsub.s32 0, %v211
    %v213 = vrot.slane %v209, %v212
    %v214 = vmul.f32 %v199, %v213
    %v215 = vsel %vm125, %v214, 0.0
    %216 = vadd.xlane.f32.xlu0 %v215
    %v217 = vpop.xlane.xlu0 %216
    %v218 = vadd.f32 %v208, %v217
    %s219 = sld [smem:[#allocation2]]
    %v220 = vstv %s219
    %v221 = vadd.f32 %v218, %v220
    %v223 = vlaneseq
    %v224 = vand.u32 %v223, 127
    %v225 = vlaneseq
    %v226 = vshrl.u32 %v225, 7
    %v227 = vsub.s32 %v224, %v226
    %v228 = vrot.slane %v221, %v227
    %vm230 = vcmask 57344
    %231 = vst.msk [vmem:[#allocation3] sm:$0x1] %vm230, %v228
    // Predicated region
    $region30: #{link_predictor_forward.1} parent=1 // pred_check
      _
    $region31: #{link_predictor_forward.1} parent=1 // pred_check_branch
      %233 = sbr.rel (0) target = $region33
    $region32: #{link_predictor_forward.1} parent=1 // pred_region
      %s235 = ssub.s32 16, 16
      %236 = vsyncadd [#allocation4], %s235
      %s238 = sshll.u32 [#allocation3], 4
      %s239 = int_to_ptr.vmem [resolvable:$true] %s238
      %241 = dma.vmem_to_hbm [thread:$0]  %s239, 16, %s7, [#allocation4]
    $region33: #{link_predictor_forward.1} parent=1 // pred_fallthru
      _
    // Predicated region
    $region34: #{link_predictor_forward.1} parent=1 // pred_check
      _
    $region35: #{link_predictor_forward.1} parent=1 // pred_check_branch
      %243 = sbr.rel (0) target = $region37
    $region36: #{link_predictor_forward.1} parent=1 // pred_region
      %244 = dma.done [#allocation4], 16
    $region37: #{link_predictor_forward.1} parent=1 // pred_fallthru
      _
    %245 = vsyncpa [#allocation4], 1

</llo_original>
